<compile_context>
chip_gen: v7x
topology: tpu7x:2x2x1
jax: 0.10.0
libtpu: 0.0.40
codegen_flags: <defaults>
</compile_context>

<pallas_src>
import jax
import jax.numpy as jnp
from jax import lax
from jax.experimental import pallas as pl
from jax.experimental.pallas import tpu as pltpu


# ----------------------------- Pallas kernel --------------------------------

def _make_fused_kernel(C, H, W, G):
    """Fused residual-block kernel for one image (closure over static geometry)."""
    Wp = W + 2                       # padded width
    L = (H + 2) * Wp                 # flattened padded spatial size (lane axis)
    Lext = L + 2 * G                 # with guard lanes so tap windows never go OOB
    # tap (kh, kw) reads flat position p + (kh-1)*Wp + (kw-1)
    offsets = [(kh - 1) * Wp + (kw - 1) for kh in range(3) for kw in range(3)]

    def kernel(x_ref, w1_ref, b1_ref, w2_ref, b2_ref, mask_ref, o_ref, y1_ref):
        # x_ref:  (1, C, Lext)   padded+flattened image with guard lanes
        # w*_ref: (C, 9*C)       BN-scale-folded conv weights
        # b*_ref: (C, 1)         BN-folded bias
        # mask_ref: (1, L)       1 inside the HxW window, 0 on the padding ring
        # o_ref:  (1, C, L)      output on the padded grid (ring discarded by wrapper)
        # y1_ref: (C, Lext)      VMEM scratch holding the stage-1 activation
        mask = mask_ref[...]

        # ---- stage 1: conv1 (3x3, pad=1) + folded bn1 + relu -------------------
        # im2col in VMEM: stack the 9 lane-shifted windows along sublanes.
        p1 = jnp.concatenate(
            [x_ref[0, :, G + off:G + off + L] for off in offsets], axis=0)  # (9C, L)
        y1 = jnp.dot(w1_ref[...], p1, preferred_element_type=jnp.float32)   # (C, L)
        y1 = jnp.maximum(y1 + b1_ref[...], 0.0) * mask      # zero the padding ring

        # keep y1 resident in VMEM; guard lanes only ever feed discarded border
        # outputs, but zero them for determinism.
        y1_ref[...] = jnp.zeros((C, Lext), jnp.float32)
        y1_ref[:, G:G + L] = y1

        # ---- stage 2: conv2 + folded bn2 + identity residual + relu ------------
        p2 = jnp.concatenate(
            [y1_ref[:, G + off:G + off + L] for off in offsets], axis=0)    # (9C, L)
        y2 = jnp.dot(w2_ref[...], p2, preferred_element_type=jnp.float32)   # (C, L)
        y2 = y2 + b2_ref[...] + x_ref[0, :, G:G + L]        # residual (zero on ring)
        o_ref[0] = jnp.maximum(y2, 0.0).astype(o_ref.dtype)

    return kernel


# ------------------------------ JAX wrapper ----------------------------------

@jax.jit
def residual_block_forward(x_nchw, params):
    """Forward pass of ResidualBlock (stride=1, no downsample), NCHW in/out."""
    N, C, H, W = x_nchw.shape
    assert params["w1"].shape[-1] == C, "identity shortcut requires C_in == C_out"
    Hp, Wp = H + 2, W + 2
    L = Hp * Wp
    G = pl.cdiv(Wp + 1, 128) * 128          # 128-aligned guard, >= max |tap offset|
    Lext = L + 2 * G
    K = 9 * C

    # Fold eval-mode BatchNorm (+ conv bias): scale into weight rows, bias separate.
    def fold(w_hwio, cb, g, be, m, v, eps=1e-5):
        s = g / jnp.sqrt(v + eps)
        wm = jnp.transpose(w_hwio, (3, 0, 1, 2)).reshape(C, K)   # (Cout, 9*Cin)
        return wm * s[:, None], ((cb - m) * s + be)[:, None]

    w1m, b1 = fold(params["w1"], params["b1"], params["g1"], params["be1"],
                   params["m1"], params["v1"])
    w2m, b2 = fold(params["w2"], params["b2"], params["g2"], params["be2"],
                   params["m2"], params["v2"])

    # Zero-pad spatially, flatten HxW onto the lane axis, add guard lanes.
    xf = jnp.pad(x_nchw, ((0, 0), (0, 0), (1, 1), (1, 1))).reshape(N, C, L)
    x_ext = jnp.pad(xf, ((0, 0), (0, 0), (G, G)))                # (N, C, Lext)

    # Interior mask on the padded grid (zero on the 1-pixel padding ring).
    hh = (jnp.arange(Hp) >= 1) & (jnp.arange(Hp) <= H)
    ww = (jnp.arange(Wp) >= 1) & (jnp.arange(Wp) <= W)
    mask = (hh[:, None] & ww[None, :]).astype(jnp.float32).reshape(1, L)

    kernel = _make_fused_kernel(C, H, W, G)

    out_flat = pl.pallas_call(
        kernel,
        out_shape=jax.ShapeDtypeStruct((N, C, L), jnp.float32),
        grid_spec=pltpu.PrefetchScalarGridSpec(
            num_scalar_prefetch=0,
            grid=(N,),
            in_specs=[
                pl.BlockSpec((1, C, Lext), lambda n: (n, 0, 0)),   # image (per step)
                pl.BlockSpec((C, K), lambda n: (0, 0)),            # w1 (resident)
                pl.BlockSpec((C, 1), lambda n: (0, 0)),            # b1
                pl.BlockSpec((C, K), lambda n: (0, 0)),            # w2 (resident)
                pl.BlockSpec((C, 1), lambda n: (0, 0)),            # b2
                pl.BlockSpec((1, L), lambda n: (0, 0)),            # interior mask
            ],
            out_specs=pl.BlockSpec((1, C, L), lambda n: (n, 0, 0)),
            scratch_shapes=[pltpu.VMEM((C, Lext), jnp.float32)],
        ),
        compiler_params=pltpu.CompilerParams(
            dimension_semantics=("parallel",)),
    )(x_ext, w1m, b1, w2m, b2, mask)

    # Drop the padding ring: (N, C, Hp, Wp) -> interior (N, C, H, W)  (NCHW out).
    return out_flat.reshape(N, C, Hp, Wp)[:, :, 1:H + 1, 1:W + 1]


# ------------------------------ reference ------------------------------------

def _ref_forward(x_nchw, params):
    x = jnp.transpose(x_nchw, (0, 2, 3, 1))
    dn = ("NHWC", "HWIO", "NHWC")

    def conv_bn(x, w, b, g, be, m, v):
        y = lax.conv_general_dilated(x, w, (1, 1), "SAME", dimension_numbers=dn) + b
        return g * (y - m) / jnp.sqrt(v + 1e-5) + be

    y = jax.nn.relu(conv_bn(x, params["w1"], params["b1"], params["g1"],
                            params["be1"], params["m1"], params["v1"]))
    y = conv_bn(y, params["w2"], params["b2"], params["g2"],
                params["be2"], params["m2"], params["v2"])
    out = jax.nn.relu(y + x)
    return jnp.transpose(out, (0, 3, 1, 2))


# -------------------------------- main ----------------------------------------

if __name__ == "__main__":
    N, C, H, W = 2, 8, 16, 16       # in_channels == out_channels, stride=1, no downsample
    ks = jax.random.split(jax.random.PRNGKey(0), 13)

    params = {
        # conv weights in HWIO layout (== torch OIHW transposed (2, 3, 1, 0))
        "w1": jax.random.normal(ks[0], (3, 3, C, C), jnp.float32) * 0.1,
        "b1": jax.random.normal(ks[1], (C,), jnp.float32) * 0.05,
        "g1": 1.0 + 0.1 * jax.random.normal(ks[2], (C,), jnp.float32),
        "be1": 0.05 * jax.random.normal(ks[3], (C,), jnp.float32),
        "m1": 0.1 * jax.random.normal(ks[4], (C,), jnp.float32),
        "v1": 1.0 + 0.1 * jnp.abs(jax.random.normal(ks[5], (C,), jnp.float32)),
        "w2": jax.random.normal(ks[6], (3, 3, C, C), jnp.float32) * 0.1,
        "b2": jax.random.normal(ks[7], (C,), jnp.float32) * 0.05,
        "g2": 1.0 + 0.1 * jax.random.normal(ks[8], (C,), jnp.float32),
        "be2": 0.05 * jax.random.normal(ks[9], (C,), jnp.float32),
        "m2": 0.1 * jax.random.normal(ks[10], (C,), jnp.float32),
        "v2": 1.0 + 0.1 * jnp.abs(jax.random.normal(ks[11], (C,), jnp.float32)),
    }

    x = jax.random.normal(ks[12], (N, C, H, W), jnp.float32)

    out = jax.block_until_ready(residual_block_forward(x, params))

    ref = _ref_forward(x, params)
    assert out.shape == (N, C, H, W)
    assert jnp.allclose(out, ref, atol=1e-4, rtol=1e-4), \
        f"max err {jnp.max(jnp.abs(out - ref))}"

    print("KERNEL_OK")
</pallas_src>

<mosaic_0001>
module attributes {stable_mosaic.version = 11 : i64} {
  func.func @kernel(%arg0: i32, %arg1: memref<1x8x580xf32, #tpu.memory_space<vmem>>, %arg2: memref<8x72xf32, #tpu.memory_space<vmem>>, %arg3: memref<8x1xf32, #tpu.memory_space<vmem>>, %arg4: memref<8x72xf32, #tpu.memory_space<vmem>>, %arg5: memref<8x1xf32, #tpu.memory_space<vmem>>, %arg6: memref<1x324xf32, #tpu.memory_space<vmem>>, %arg7: memref<1x8x324xf32, #tpu.memory_space<vmem>>, %arg8: memref<8x580xf32, #tpu.memory_space<vmem>>) attributes {dimension_semantics = [#tpu.dimension_semantics<parallel>], iteration_bounds = array<i64: 2>, scalar_prefetch = 0 : i64, scratch_operands = 1 : i64, tpu.core_type = #tpu.core_type<tc>, window_params = [{transform_indices = @transform_0, window_bounds = array<i64: 1, 8, 580>}, {pipeline_mode = #tpu.pipeline_mode<synchronous>, transform_indices = @transform_1, window_bounds = array<i64: 8, 72>}, {pipeline_mode = #tpu.pipeline_mode<synchronous>, transform_indices = @transform_2, window_bounds = array<i64: 8, 1>}, {pipeline_mode = #tpu.pipeline_mode<synchronous>, transform_indices = @transform_3, window_bounds = array<i64: 8, 72>}, {pipeline_mode = #tpu.pipeline_mode<synchronous>, transform_indices = @transform_4, window_bounds = array<i64: 8, 1>}, {pipeline_mode = #tpu.pipeline_mode<synchronous>, transform_indices = @transform_5, window_bounds = array<i64: 1, 324>}, {transform_indices = @transform_6, window_bounds = array<i64: 1, 8, 324>}]} {
    %c0 = arith.constant 0 : index
    %c0_0 = arith.constant 0 : index
    %0 = vector.load %arg6[%c0, %c0_0] : memref<1x324xf32, #tpu.memory_space<vmem>>, vector<1x324xf32>
    %c0_1 = arith.constant 0 : index
    %c0_2 = arith.constant 0 : index
    %c109 = arith.constant 109 : index
    %1 = vector.load %arg1[%c0_1, %c0_2, %c109] : memref<1x8x580xf32, #tpu.memory_space<vmem>>, vector<1x8x324xf32>
    %2 = vector.shape_cast %1 : vector<1x8x324xf32> to vector<8x324xf32>
    %c0_3 = arith.constant 0 : index
    %c0_4 = arith.constant 0 : index
    %c110 = arith.constant 110 : index
    %3 = vector.load %arg1[%c0_3, %c0_4, %c110] : memref<1x8x580xf32, #tpu.memory_space<vmem>>, vector<1x8x324xf32>
    %4 = vector.shape_cast %3 : vector<1x8x324xf32> to vector<8x324xf32>
    %c0_5 = arith.constant 0 : index
    %c0_6 = arith.constant 0 : index
    %c111 = arith.constant 111 : index
    %5 = vector.load %arg1[%c0_5, %c0_6, %c111] : memref<1x8x580xf32, #tpu.memory_space<vmem>>, vector<1x8x324xf32>
    %6 = vector.shape_cast %5 : vector<1x8x324xf32> to vector<8x324xf32>
    %c0_7 = arith.constant 0 : index
    %c0_8 = arith.constant 0 : index
    %c127 = arith.constant 127 : index
    %7 = vector.load %arg1[%c0_7, %c0_8, %c127] : memref<1x8x580xf32, #tpu.memory_space<vmem>>, vector<1x8x324xf32>
    %8 = vector.shape_cast %7 : vector<1x8x324xf32> to vector<8x324xf32>
    %c0_9 = arith.constant 0 : index
    %c0_10 = arith.constant 0 : index
    %c128 = arith.constant 128 : index
    %9 = vector.load %arg1[%c0_9, %c0_10, %c128] : memref<1x8x580xf32, #tpu.memory_space<vmem>>, vector<1x8x324xf32>
    %10 = vector.shape_cast %9 : vector<1x8x324xf32> to vector<8x324xf32>
    %c0_11 = arith.constant 0 : index
    %c0_12 = arith.constant 0 : index
    %c129 = arith.constant 129 : index
    %11 = vector.load %arg1[%c0_11, %c0_12, %c129] : memref<1x8x580xf32, #tpu.memory_space<vmem>>, vector<1x8x324xf32>
    %12 = vector.shape_cast %11 : vector<1x8x324xf32> to vector<8x324xf32>
    %c0_13 = arith.constant 0 : index
    %c0_14 = arith.constant 0 : index
    %c145 = arith.constant 145 : index
    %13 = vector.load %arg1[%c0_13, %c0_14, %c145] : memref<1x8x580xf32, #tpu.memory_space<vmem>>, vector<1x8x324xf32>
    %14 = vector.shape_cast %13 : vector<1x8x324xf32> to vector<8x324xf32>
    %c0_15 = arith.constant 0 : index
    %c0_16 = arith.constant 0 : index
    %c146 = arith.constant 146 : index
    %15 = vector.load %arg1[%c0_15, %c0_16, %c146] : memref<1x8x580xf32, #tpu.memory_space<vmem>>, vector<1x8x324xf32>
    %16 = vector.shape_cast %15 : vector<1x8x324xf32> to vector<8x324xf32>
    %c0_17 = arith.constant 0 : index
    %c0_18 = arith.constant 0 : index
    %c147 = arith.constant 147 : index
    %17 = vector.load %arg1[%c0_17, %c0_18, %c147] : memref<1x8x580xf32, #tpu.memory_space<vmem>>, vector<1x8x324xf32>
    %18 = vector.shape_cast %17 : vector<1x8x324xf32> to vector<8x324xf32>
    %19 = tpu.concatenate %2, %4, %6, %8, %10, %12, %14, %16, %18 in 0 : vector<8x324xf32>, vector<8x324xf32>, vector<8x324xf32>, vector<8x324xf32>, vector<8x324xf32>, vector<8x324xf32>, vector<8x324xf32>, vector<8x324xf32>, vector<8x324xf32> -> vector<72x324xf32>
    %c0_19 = arith.constant 0 : index
    %c0_20 = arith.constant 0 : index
    %20 = vector.load %arg2[%c0_19, %c0_20] : memref<8x72xf32, #tpu.memory_space<vmem>>, vector<8x72xf32>
    %cst = arith.constant dense<0.000000e+00> : vector<8x324xf32>
    %21 = tpu.matmul %20, %19, %cst {dimension_numbers = #tpu.dot_dimension_numbers<[1], [0], [0], [1], [0, 0, 1, 1], [], []>} : vector<8x72xf32>, vector<72x324xf32>, vector<8x324xf32> -> vector<8x324xf32>
    %c0_21 = arith.constant 0 : index
    %c0_22 = arith.constant 0 : index
    %22 = vector.load %arg3[%c0_21, %c0_22] : memref<8x1xf32, #tpu.memory_space<vmem>>, vector<8x1xf32>
    %23 = vector.broadcast %22 : vector<8x1xf32> to vector<8x324xf32>
    %24 = arith.addf %21, %23 : vector<8x324xf32>
    %cst_23 = arith.constant 0.000000e+00 : f32
    %25 = vector.broadcast %cst_23 : f32 to vector<8x324xf32>
    %26 = arith.maximumf %24, %25 : vector<8x324xf32>
    %27 = vector.broadcast %0 : vector<1x324xf32> to vector<8x324xf32>
    %28 = arith.mulf %26, %27 : vector<8x324xf32>
    %cst_24 = arith.constant 0.000000e+00 : f32
    %29 = vector.broadcast %cst_24 : f32 to vector<8x580xf32>
    %c0_25 = arith.constant 0 : index
    %c0_26 = arith.constant 0 : index
    %30 = vector.load %arg8[%c0_25, %c0_26] : memref<8x580xf32, #tpu.memory_space<vmem>>, vector<8x580xf32>
    tpu.vector_store %arg8[%c0_25, %c0_26], %29 {strides = array<i32>} : memref<8x580xf32, #tpu.memory_space<vmem>>, vector<8x580xf32>,
    %c0_27 = arith.constant 0 : index
    %c128_28 = arith.constant 128 : index
    %31 = vector.load %arg8[%c0_27, %c128_28] : memref<8x580xf32, #tpu.memory_space<vmem>>, vector<8x324xf32>
    tpu.vector_store %arg8[%c0_27, %c128_28], %28 {strides = array<i32>} : memref<8x580xf32, #tpu.memory_space<vmem>>, vector<8x324xf32>,
    %c0_29 = arith.constant 0 : index
    %c109_30 = arith.constant 109 : index
    %32 = vector.load %arg8[%c0_29, %c109_30] : memref<8x580xf32, #tpu.memory_space<vmem>>, vector<8x324xf32>
    %c0_31 = arith.constant 0 : index
    %c110_32 = arith.constant 110 : index
    %33 = vector.load %arg8[%c0_31, %c110_32] : memref<8x580xf32, #tpu.memory_space<vmem>>, vector<8x324xf32>
    %c0_33 = arith.constant 0 : index
    %c111_34 = arith.constant 111 : index
    %34 = vector.load %arg8[%c0_33, %c111_34] : memref<8x580xf32, #tpu.memory_space<vmem>>, vector<8x324xf32>
    %c0_35 = arith.constant 0 : index
    %c127_36 = arith.constant 127 : index
    %35 = vector.load %arg8[%c0_35, %c127_36] : memref<8x580xf32, #tpu.memory_space<vmem>>, vector<8x324xf32>
    %c0_37 = arith.constant 0 : index
    %c128_38 = arith.constant 128 : index
    %36 = vector.load %arg8[%c0_37, %c128_38] : memref<8x580xf32, #tpu.memory_space<vmem>>, vector<8x324xf32>
    %c0_39 = arith.constant 0 : index
    %c129_40 = arith.constant 129 : index
    %37 = vector.load %arg8[%c0_39, %c129_40] : memref<8x580xf32, #tpu.memory_space<vmem>>, vector<8x324xf32>
    %c0_41 = arith.constant 0 : index
    %c145_42 = arith.constant 145 : index
    %38 = vector.load %arg8[%c0_41, %c145_42] : memref<8x580xf32, #tpu.memory_space<vmem>>, vector<8x324xf32>
    %c0_43 = arith.constant 0 : index
    %c146_44 = arith.constant 146 : index
    %39 = vector.load %arg8[%c0_43, %c146_44] : memref<8x580xf32, #tpu.memory_space<vmem>>, vector<8x324xf32>
    %c0_45 = arith.constant 0 : index
    %c147_46 = arith.constant 147 : index
    %40 = vector.load %arg8[%c0_45, %c147_46] : memref<8x580xf32, #tpu.memory_space<vmem>>, vector<8x324xf32>
    %41 = tpu.concatenate %32, %33, %34, %35, %36, %37, %38, %39, %40 in 0 : vector<8x324xf32>, vector<8x324xf32>, vector<8x324xf32>, vector<8x324xf32>, vector<8x324xf32>, vector<8x324xf32>, vector<8x324xf32>, vector<8x324xf32>, vector<8x324xf32> -> vector<72x324xf32>
    %c0_47 = arith.constant 0 : index
    %c0_48 = arith.constant 0 : index
    %42 = vector.load %arg4[%c0_47, %c0_48] : memref<8x72xf32, #tpu.memory_space<vmem>>, vector<8x72xf32>
    %cst_49 = arith.constant dense<0.000000e+00> : vector<8x324xf32>
    %43 = tpu.matmul %42, %41, %cst_49 {dimension_numbers = #tpu.dot_dimension_numbers<[1], [0], [0], [1], [0, 0, 1, 1], [], []>} : vector<8x72xf32>, vector<72x324xf32>, vector<8x324xf32> -> vector<8x324xf32>
    %c0_50 = arith.constant 0 : index
    %c0_51 = arith.constant 0 : index
    %44 = vector.load %arg5[%c0_50, %c0_51] : memref<8x1xf32, #tpu.memory_space<vmem>>, vector<8x1xf32>
    %45 = vector.broadcast %44 : vector<8x1xf32> to vector<8x324xf32>
    %46 = arith.addf %43, %45 : vector<8x324xf32>
    %c0_52 = arith.constant 0 : index
    %c0_53 = arith.constant 0 : index
    %c128_54 = arith.constant 128 : index
    %47 = vector.load %arg1[%c0_52, %c0_53, %c128_54] : memref<1x8x580xf32, #tpu.memory_space<vmem>>, vector<1x8x324xf32>
    %48 = vector.shape_cast %47 : vector<1x8x324xf32> to vector<8x324xf32>
    %49 = arith.addf %46, %48 : vector<8x324xf32>
    %cst_55 = arith.constant 0.000000e+00 : f32
    %50 = vector.broadcast %cst_55 : f32 to vector<8x324xf32>
    %51 = arith.maximumf %49, %50 : vector<8x324xf32>
    %c0_56 = arith.constant 0 : index
    %c0_57 = arith.constant 0 : index
    %c0_58 = arith.constant 0 : index
    %52 = vector.load %arg7[%c0_56, %c0_57, %c0_58] : memref<1x8x324xf32, #tpu.memory_space<vmem>>, vector<1x8x324xf32>
    %53 = vector.shape_cast %52 : vector<1x8x324xf32> to vector<8x324xf32>
    %54 = vector.shape_cast %51 : vector<8x324xf32> to vector<1x8x324xf32>
    tpu.vector_store %arg7[%c0_56, %c0_57, %c0_58], %54 {strides = array<i32>} : memref<1x8x324xf32, #tpu.memory_space<vmem>>, vector<1x8x324xf32>,
    return
  }
  func.func @transform_0(%arg0: i32) -> (i32, i32, i32) {
    %c0_i32 = arith.constant 0 : i32
    %c0_i32_0 = arith.constant 0 : i32
    %c0_i32_1 = arith.constant 0 : i32
    return %arg0, %c0_i32, %c0_i32_0 : i32, i32, i32
  }
  func.func @transform_1(%arg0: i32) -> (i32, i32) {
    %c0_i32 = arith.constant 0 : i32
    %c0_i32_0 = arith.constant 0 : i32
    %c0_i32_1 = arith.constant 0 : i32
    return %c0_i32, %c0_i32_0 : i32, i32
  }
  func.func @transform_2(%arg0: i32) -> (i32, i32) {
    %c0_i32 = arith.constant 0 : i32
    %c0_i32_0 = arith.constant 0 : i32
    %c0_i32_1 = arith.constant 0 : i32
    return %c0_i32, %c0_i32_0 : i32, i32
  }
  func.func @transform_3(%arg0: i32) -> (i32, i32) {
    %c0_i32 = arith.constant 0 : i32
    %c0_i32_0 = arith.constant 0 : i32
    %c0_i32_1 = arith.constant 0 : i32
    return %c0_i32, %c0_i32_0 : i32, i32
  }
  func.func @transform_4(%arg0: i32) -> (i32, i32) {
    %c0_i32 = arith.constant 0 : i32
    %c0_i32_0 = arith.constant 0 : i32
    %c0_i32_1 = arith.constant 0 : i32
    return %c0_i32, %c0_i32_0 : i32, i32
  }
  func.func @transform_5(%arg0: i32) -> (i32, i32) {
    %c0_i32 = arith.constant 0 : i32
    %c0_i32_0 = arith.constant 0 : i32
    %c0_i32_1 = arith.constant 0 : i32
    return %c0_i32, %c0_i32_0 : i32, i32
  }
  func.func @transform_6(%arg0: i32) -> (i32, i32, i32) {
    %c0_i32 = arith.constant 0 : i32
    %c0_i32_0 = arith.constant 0 : i32
    %c0_i32_1 = arith.constant 0 : i32
    return %arg0, %c0_i32, %c0_i32_0 : i32, i32, i32
  }
}

</mosaic_0001>

<llo_original>
// kernel: residual_block_forward.1
$region0: #{residual_block_forward.1}
  #allocation0 [shape = 'u32[]', space=smem, size = 0x4, offset = 0x4, fixed_abs, tag = 'smem constant byte address 0x4 - core index']
  #allocation1 [shape = 'u32[144,128]{1,0:T(1,128)}', space=vmem, size = 0x12000, scoped, tag = 'internal scratch']
  #allocation2 [shape = 'f32[8,580]{1,0:T(8,128)}', space=vmem, size = 0x5000, scoped, tag = 'scratch operand']
  %s0 = inlined_call_operand.vmem [shape: f32[2,8,580], index: 0, kind: input, shape index: {}]
  %s1 = inlined_call_operand.vmem [shape: f32[8,72], index: 1, kind: input, shape index: {}]
  %s2 = inlined_call_operand.vmem [shape: f32[8,1], index: 2, kind: input, shape index: {}]
  %s3 = inlined_call_operand.vmem [shape: f32[8,72], index: 3, kind: input, shape index: {}]
  %s4 = inlined_call_operand.vmem [shape: f32[8,1], index: 4, kind: input, shape index: {}]
  %s5 = inlined_call_operand.vmem [shape: f32[1,324], index: 5, kind: input, shape index: {}]
  %s6 = inlined_call_operand.vmem [shape: f32[2,8,324], index: 6, kind: output, shape index: {}]
  %s7 = sld [smem:[#allocation0]]
  $region57: #{residual_block_forward.1} parent=0
    _
  %s9 = ssub.s32 1, %s7
  %s10 = scalar_select 0, %s9, %s7
  loop: start=0, step=1, limit=4
  $region2: #{residual_block_forward.1} parent=0 // loop_pre_header
    _
  $region3: #{residual_block_forward.1} parent=0 // loop_header
    %s12 = sphi 0, %s16
    %p13 = scmp.ge.s32.totalorder %s12, 4
    %s22 = sphi 0, %s24
    %s25 = sphi 0, %s22
    %s26 = sphi 0, %s25
    %s42 = sphi 0, %s26
    %s46 = sphi 0, %s46
    %s48 = sphi 0, %s46
    %s49 = sphi 0, %s48
    %s63 = sphi 0, %s49
    %s67 = sphi 0, %s67
    %s69 = sphi 0, %s67
    %s70 = sphi 0, %s69
    %s84 = sphi 0, %s70
    %s88 = sphi 0, %s88
    %s90 = sphi 0, %s88
    %s91 = sphi 0, %s90
    %s105 = sphi 0, %s91
    %s109 = sphi 0, %s109
    %s111 = sphi 0, %s109
    %s112 = sphi 0, %s111
    %s126 = sphi 0, %s112
    %s130 = sphi 0, %s130
    %s132 = sphi 0, %s130
    %s133 = sphi 0, %s132
    %s147 = sphi 0, %s133
    %s153 = sphi 0, %s155
    %s156 = sphi 0, %s153
    %s157 = sphi 0, %s156
    %s173 = sphi 0, %s157
  $region4: #{residual_block_forward.1} parent=0 // loop_header_branch
    %15 = sbr.rel (%p13) target = $region8
  $region5: #{residual_block_forward.1} parent=0 // loop_body
    %s17 = ssub.s32 %s12, 1
    %s18 = ssub.s32 %s12, 2
    %s19 = sadd.s32 %s12, 1
    %s20 = ssub.s32 %s12, %s19
    %p21 = scmp.eq.s32.totalorder %s20, 0
    %s23 = sadd.s32 %s22, 1
    %s24 = scalar_select %p21, %s22, %s23
    %p27 = pneg %p21
    %p28 = scmp.eq.s32.totalorder %s12, 1
    %p29 = por %p27, %p28
    %p30 = scmp.ne.s32.totalorder %s22, %s25
    %p31 = scmp.eq.s32.totalorder %s12, 0
    %p32 = por %p30, %p31
    %p33 = scmp.ne.s32.totalorder %s22, %s25
    %p34 = scmp.eq.s32.totalorder %s17, 1
    %p35 = por %p33, %p34
    %p36 = scmp.ne.s32.totalorder %s25, %s26
    %p37 = scmp.eq.s32.totalorder %s17, 0
    %p38 = por %p36, %p37
    %p39 = scmp.ne.s32.totalorder %s25, %s26
    %p40 = scmp.eq.s32.totalorder %s18, 1
    %p41 = por %p39, %p40
    %p43 = scmp.ne.s32.totalorder %s26, %s42
    %p44 = scmp.eq.s32.totalorder %s18, 0
    %p45 = por %p43, %p44
    %s47 = sadd.s32 %s46, 1
    %p50 = scmp.eq.s32.totalorder %s12, 1
    %p51 = scmp.ne.s32.totalorder %s46, %s48
    %p52 = scmp.eq.s32.totalorder %s12, 0
    %p53 = por %p51, %p52
    %p54 = scmp.ne.s32.totalorder %s46, %s48
    %p55 = scmp.eq.s32.totalorder %s17, 1
    %p56 = por %p54, %p55
    %p57 = scmp.ne.s32.totalorder %s48, %s49
    %p58 = scmp.eq.s32.totalorder %s17, 0
    %p59 = por %p57, %p58
    %p60 = scmp.ne.s32.totalorder %s48, %s49
    %p61 = scmp.eq.s32.totalorder %s18, 1
    %p62 = por %p60, %p61
    %p64 = scmp.ne.s32.totalorder %s49, %s63
    %p65 = scmp.eq.s32.totalorder %s18, 0
    %p66 = por %p64, %p65
    %s68 = sadd.s32 %s67, 1
    %p71 = scmp.eq.s32.totalorder %s12, 1
    %p72 = scmp.ne.s32.totalorder %s67, %s69
    %p73 = scmp.eq.s32.totalorder %s12, 0
    %p74 = por %p72, %p73
    %p75 = scmp.ne.s32.totalorder %s67, %s69
    %p76 = scmp.eq.s32.totalorder %s17, 1
    %p77 = por %p75, %p76
    %p78 = scmp.ne.s32.totalorder %s69, %s70
    %p79 = scmp.eq.s32.totalorder %s17, 0
    %p80 = por %p78, %p79
    %p81 = scmp.ne.s32.totalorder %s69, %s70
    %p82 = scmp.eq.s32.totalorder %s18, 1
    %p83 = por %p81, %p82
    %p85 = scmp.ne.s32.totalorder %s70, %s84
    %p86 = scmp.eq.s32.totalorder %s18, 0
    %p87 = por %p85, %p86
    %s89 = sadd.s32 %s88, 1
    %p92 = scmp.eq.s32.totalorder %s12, 1
    %p93 = scmp.ne.s32.totalorder %s88, %s90
    %p94 = scmp.eq.s32.totalorder %s12, 0
    %p95 = por %p93, %p94
    %p96 = scmp.ne.s32.totalorder %s88, %s90
    %p97 = scmp.eq.s32.totalorder %s17, 1
    %p98 = por %p96, %p97
    %p99 = scmp.ne.s32.totalorder %s90, %s91
    %p100 = scmp.eq.s32.totalorder %s17, 0
    %p101 = por %p99, %p100
    %p102 = scmp.ne.s32.totalorder %s90, %s91
    %p103 = scmp.eq.s32.totalorder %s18, 1
    %p104 = por %p102, %p103
    %p106 = scmp.ne.s32.totalorder %s91, %s105
    %p107 = scmp.eq.s32.totalorder %s18, 0
    %p108 = por %p106, %p107
    %s110 = sadd.s32 %s109, 1
    %p113 = scmp.eq.s32.totalorder %s12, 1
    %p114 = scmp.ne.s32.totalorder %s109, %s111
    %p115 = scmp.eq.s32.totalorder %s12, 0
    %p116 = por %p114, %p115
    %p117 = scmp.ne.s32.totalorder %s109, %s111
    %p118 = scmp.eq.s32.totalorder %s17, 1
    %p119 = por %p117, %p118
    %p120 = scmp.ne.s32.totalorder %s111, %s112
    %p121 = scmp.eq.s32.totalorder %s17, 0
    %p122 = por %p120, %p121
    %p123 = scmp.ne.s32.totalorder %s111, %s112
    %p124 = scmp.eq.s32.totalorder %s18, 1
    %p125 = por %p123, %p124
    %p127 = scmp.ne.s32.totalorder %s112, %s126
    %p128 = scmp.eq.s32.totalorder %s18, 0
    %p129 = por %p127, %p128
    %s131 = sadd.s32 %s130, 1
    %p134 = scmp.eq.s32.totalorder %s12, 1
    %p135 = scmp.ne.s32.totalorder %s130, %s132
    %p136 = scmp.eq.s32.totalorder %s12, 0
    %p137 = por %p135, %p136
    %p138 = scmp.ne.s32.totalorder %s130, %s132
    %p139 = scmp.eq.s32.totalorder %s17, 1
    %p140 = por %p138, %p139
    %p141 = scmp.ne.s32.totalorder %s132, %s133
    %p142 = scmp.eq.s32.totalorder %s17, 0
    %p143 = por %p141, %p142
    %p144 = scmp.ne.s32.totalorder %s132, %s133
    %p145 = scmp.eq.s32.totalorder %s18, 1
    %p146 = por %p144, %p145
    %p148 = scmp.ne.s32.totalorder %s133, %s147
    %p149 = scmp.eq.s32.totalorder %s18, 0
    %p150 = por %p148, %p149
    %s151 = ssub.s32 %s12, %s19
    %p152 = scmp.eq.s32.totalorder %s151, 0
    %s154 = sadd.s32 %s153, 1
    %s155 = scalar_select %p152, %s153, %s154
    %p158 = pneg %p152
    %p159 = scmp.eq.s32.totalorder %s12, 1
    %p160 = por %p158, %p159
    %p161 = scmp.ne.s32.totalorder %s153, %s156
    %p162 = scmp.eq.s32.totalorder %s12, 0
    %p163 = por %p161, %p162
    %p164 = scmp.ne.s32.totalorder %s153, %s156
    %p165 = scmp.eq.s32.totalorder %s17, 1
    %p166 = por %p164, %p165
    %p167 = scmp.ne.s32.totalorder %s156, %s157
    %p168 = scmp.eq.s32.totalorder %s17, 0
    %p169 = por %p167, %p168
    %p170 = scmp.ne.s32.totalorder %s156, %s157
    %p171 = scmp.eq.s32.totalorder %s18, 1
    %p172 = por %p170, %p171
    %p174 = scmp.ne.s32.totalorder %s157, %s173
    %p175 = scmp.eq.s32.totalorder %s18, 0
    %p176 = por %p174, %p175
    %p177 = scmp.le.s32.totalorder 1, %s12
    %p178 = scmp.lt.s32.totalorder %s12, 3
    %p179 = pnand %p177, %p178
    %p180 = pneg %p179
    // Predicated region
    $region9: #{residual_block_forward.1} parent=5 // pred_check
      _
    $region10: #{residual_block_forward.1} parent=5 // pred_check_branch
      %182 = sbr.rel (%p179) target = $region12
    $region11: #{residual_block_forward.1} parent=5 // pred_region
      %s183 = ssub.s32 %s12, 1
      // Predicated region
      $region13: #{residual_block_forward.1} parent=11 // pred_check
        %p184 = pneg %p59
      $region14: #{residual_block_forward.1} parent=11 // pred_check_branch
        %186 = sbr.rel (%p184) target = $region16
      $region15: #{residual_block_forward.1} parent=11 // pred_region
        _
      $region16: #{residual_block_forward.1} parent=11 // pred_fallthru
        _
      // Predicated region
      $region17: #{residual_block_forward.1} parent=11 // pred_check
        %p187 = pneg %p80
      $region18: #{residual_block_forward.1} parent=11 // pred_check_branch
        %189 = sbr.rel (%p187) target = $region20
      $region19: #{residual_block_forward.1} parent=11 // pred_region
        _
      $region20: #{residual_block_forward.1} parent=11 // pred_fallthru
        _
      // Predicated region
      $region21: #{residual_block_forward.1} parent=11 // pred_check
        %p190 = pneg %p101
      $region22: #{residual_block_forward.1} parent=11 // pred_check_branch
        %192 = sbr.rel (%p190) target = $region24
      $region23: #{residual_block_forward.1} parent=11 // pred_region
        _
      $region24: #{residual_block_forward.1} parent=11 // pred_fallthru
        _
      // Predicated region
      $region25: #{residual_block_forward.1} parent=11 // pred_check
        %p193 = pneg %p122
      $region26: #{residual_block_forward.1} parent=11 // pred_check_branch
        %195 = sbr.rel (%p193) target = $region28
      $region27: #{residual_block_forward.1} parent=11 // pred_region
        _
      $region28: #{residual_block_forward.1} parent=11 // pred_fallthru
        _
      // Predicated region
      $region29: #{residual_block_forward.1} parent=11 // pred_check
        %p196 = pneg %p143
      $region30: #{residual_block_forward.1} parent=11 // pred_check_branch
        %198 = sbr.rel (%p196) target = $region32
      $region31: #{residual_block_forward.1} parent=11 // pred_region
        _
      $region32: #{residual_block_forward.1} parent=11 // pred_fallthru
        _
    $region12: #{residual_block_forward.1} parent=5 // pred_fallthru
      _
    %p199 = scmp.lt.s32.totalorder %s12, 2
    // Predicated region
    $region33: #{residual_block_forward.1} parent=5 // pred_check
      %p200 = pneg %p199
    $region34: #{residual_block_forward.1} parent=5 // pred_check_branch
      %202 = sbr.rel (%p200) target = $region36
    $region35: #{residual_block_forward.1} parent=5 // pred_region
      // Predicated region
      $region37: #{residual_block_forward.1} parent=35 // pred_check
        %p203 = pneg %p32
      $region38: #{residual_block_forward.1} parent=35 // pred_check_branch
        %205 = sbr.rel (%p203) target = $region40
      $region39: #{residual_block_forward.1} parent=35 // pred_region
        %p206 = scmp.lt.s32.totalorder %s12, 1
        %s207 = scalar_select %p206, %s12, 1
        %s208 = smul.addr %s207, 5
        %s209 = smul.addr %s208, 8
        %s210 = scalar_lea.vmem %s0, %s209
      $region40: #{residual_block_forward.1} parent=35 // pred_fallthru
        _
    $region36: #{residual_block_forward.1} parent=5 // pred_fallthru
      _
    %p211 = scmp.le.s32.totalorder 1, %s12
    %p212 = scmp.lt.s32.totalorder %s12, 3
    %p213 = pnand %p211, %p212
    %p214 = pneg %p213
    // Predicated region
    $region41: #{residual_block_forward.1} parent=5 // pred_check
      _
    $region42: #{residual_block_forward.1} parent=5 // pred_check_branch
      %216 = sbr.rel (%p213) target = $region44
    $region43: #{residual_block_forward.1} parent=5 // pred_region
      %s217 = ssub.s32 %s12, 1
      %p218 = scmp.lt.s32.totalorder %s17, 1
      %s219 = scalar_select %p218, %s17, 1
      %s220 = smul.addr %s219, 5
      %s221 = smul.addr %s220, 8
      %s222 = scalar_lea.vmem %s0, %s221
      %p223 = pneg %p38
      %p224 = pneg %p35
      %p225 = pneg %p59
      %p226 = pneg %p56
      %p227 = pneg %p80
      %p228 = pneg %p77
      %p229 = pneg %p101
      %p230 = pneg %p98
      %p231 = pneg %p122
      %p232 = pneg %p119
      %p233 = pneg %p143
      %p234 = pneg %p140
      %p235 = pneg %p169
      %p236 = pneg %p166
      %p237 = scmp.lt.s32.totalorder %s17, 1
      %s238 = scalar_select %p237, %s17, 1
      %s239 = smul.addr %s238, 3
      %s240 = smul.addr %s239, 8
      %s241 = scalar_lea.vmem %s6, %s240
      %p242 = scmp.lt.s32.totalorder %s17, 1
      %s243 = scalar_select %p242, %s17, 1
      %s244 = smul.addr %s243, 5
      %s245 = smul.addr %s244, 8
      %s246 = scalar_lea.vmem %s0, %s245
      %p247 = scmp.lt.s32.totalorder %s17, 1
      %s248 = scalar_select %p247, %s17, 1
      %s249 = smul.addr %s248, 3
      %s250 = smul.addr %s249, 8
      %s251 = scalar_lea.vmem %s6, %s250
      %v252 = vld [vmem:[%s5] sm:$0x7]
      %v253 = vld [vmem:[%s246] sm:$0xff]
      %v254 = vld [vmem:[%s246 + $0x8] sm:$0xff]
      %v255 = vld [vmem:[%s246 + $0x10] sm:$0xff]
      %v256 = vld [vmem:[%s246 + $0x18] sm:$0xff]
      %261 = vrot.lane.b32.xlu0 %v253, 127
      %v262 = vpop.permute.xlu0 %261
      %263 = vrot.lane.b32.xlu0 %v254, 127
      %v264 = vpop.permute.xlu0 %263
      %265 = vrot.lane.b32.xlu0 %v255, 127
      %v266 = vpop.permute.xlu0 %265
      %267 = vrot.lane.b32.xlu0 %v256, 127
      %v268 = vpop.permute.xlu0 %267
      %vm269 = vcmask 1039360
      %v270 = vsel %vm269, %v262, %v264
      %v271 = vsel %vm269, %v264, %v266
      %v272 = vsel %vm269, %v266, %v268
      %273 = vrot.lane.b32.xlu0 %v253, 126
      %v274 = vpop.permute.xlu0 %273
      %275 = vrot.lane.b32.xlu0 %v254, 126
      %v276 = vpop.permute.xlu0 %275
      %277 = vrot.lane.b32.xlu0 %v255, 126
      %v278 = vpop.permute.xlu0 %277
      %279 = vrot.lane.b32.xlu0 %v256, 126
      %v280 = vpop.permute.xlu0 %279
      %vm281 = vcmask 1031168
      %v282 = vsel %vm281, %v274, %v276
      %v283 = vsel %vm281, %v276, %v278
      %v284 = vsel %vm281, %v278, %v280
      %285 = vrot.lane.b32.xlu0 %v253, 110
      %v286 = vpop.permute.xlu0 %285
      %287 = vrot.lane.b32.xlu0 %v254, 110
      %v288 = vpop.permute.xlu0 %287
      %289 = vrot.lane.b32.xlu0 %v255, 110
      %v290 = vpop.permute.xlu0 %289
      %291 = vrot.lane.b32.xlu0 %v256, 110
      %v292 = vpop.permute.xlu0 %291
      %vm293 = vcmask 900096
      %v294 = vsel %vm293, %v286, %v288
      %v295 = vsel %vm293, %v288, %v290
      %v296 = vsel %vm293, %v290, %v292
      %297 = vrot.lane.b32.xlu0 %v254, 109
      %v298 = vpop.permute.xlu0 %297
      %299 = vrot.lane.b32.xlu0 %v255, 109
      %v300 = vpop.permute.xlu0 %299
      %301 = vrot.lane.b32.xlu0 %v256, 109
      %v302 = vpop.permute.xlu0 %301
      %vm303 = vcmask 891904
      %v304 = vsel %vm303, %v298, %v300
      %v305 = vsel %vm303, %v300, %v302
      %306 = vrot.lane.b32.xlu0 %v254, 108
      %v307 = vpop.permute.xlu0 %306
      %308 = vrot.lane.b32.xlu0 %v255, 108
      %v309 = vpop.permute.xlu0 %308
      %310 = vrot.lane.b32.xlu0 %v256, 108
      %v311 = vpop.permute.xlu0 %310
      %vm312 = vcmask 883712
      %v313 = vsel %vm312, %v307, %v309
      %v314 = vsel %vm312, %v309, %v311
      %315 = vrot.lane.b32.xlu0 %v254, 92
      %v316 = vpop.permute.xlu0 %315
      %317 = vrot.lane.b32.xlu0 %v255, 92
      %v318 = vpop.permute.xlu0 %317
      %319 = vrot.lane.b32.xlu0 %v256, 92
      %v320 = vpop.permute.xlu0 %319
      %vm321 = vcmask 752640
      %v322 = vsel %vm321, %v316, %v318
      %v323 = vsel %vm321, %v318, %v320
      %324 = vrot.lane.b32.xlu0 %v254, 91
      %v325 = vpop.permute.xlu0 %324
      %326 = vrot.lane.b32.xlu0 %v255, 91
      %v327 = vpop.permute.xlu0 %326
      %328 = vrot.lane.b32.xlu0 %v256, 91
      %v329 = vpop.permute.xlu0 %328
      %vm330 = vcmask 744448
      %v331 = vsel %vm330, %v325, %v327
      %v332 = vsel %vm330, %v327, %v329
      %333 = vrot.lane.b32.xlu0 %v254, 90
      %v334 = vpop.permute.xlu0 %333
      %335 = vrot.lane.b32.xlu0 %v255, 90
      %v336 = vpop.permute.xlu0 %335
      %337 = vrot.lane.b32.xlu0 %v256, 90
      %v338 = vpop.permute.xlu0 %337
      %vm339 = vcmask 736256
      %v340 = vsel %vm339, %v334, %v336
      %v341 = vsel %vm339, %v336, %v338
      %v342 = vld [vmem:[%s1] sm:$0xff]
      %v343 = vld [vmem:[%s2] sm:$0xff]
      %345 = vset.pattern.permute.xlu0 0
      %346 = vperm.xlu0 %345, %v343
      %v347 = vpop.permute.xlu0 %346
      %349 = vrot.lane.b32.xlu0 %v253, 19
      %v350 = vpop.permute.xlu0 %349
      %351 = vrot.lane.b32.xlu0 %v254, 19
      %v352 = vpop.permute.xlu0 %351
      %353 = vrot.lane.b32.xlu0 %v255, 19
      %v354 = vpop.permute.xlu0 %353
      %355 = vrot.lane.b32.xlu0 %v256, 19
      %v356 = vpop.permute.xlu0 %355
      %357 = vrot.lane.b32.xlu0 %v270, 19
      %v358 = vpop.permute.xlu0 %357
      %359 = vrot.lane.b32.xlu0 %v271, 19
      %v360 = vpop.permute.xlu0 %359
      %361 = vrot.lane.b32.xlu0 %v272, 19
      %v362 = vpop.permute.xlu0 %361
      %363 = vrot.lane.b32.xlu0 %v268, 19
      %v364 = vpop.permute.xlu0 %363
      %365 = vrot.lane.b32.xlu0 %v282, 19
      %v366 = vpop.permute.xlu0 %365
      %367 = vrot.lane.b32.xlu0 %v283, 19
      %v368 = vpop.permute.xlu0 %367
      %369 = vrot.lane.b32.xlu0 %v284, 19
      %v370 = vpop.permute.xlu0 %369
      %371 = vrot.lane.b32.xlu0 %v280, 19
      %v372 = vpop.permute.xlu0 %371
      %373 = vrot.lane.b32.xlu0 %v294, 19
      %v374 = vpop.permute.xlu0 %373
      %375 = vrot.lane.b32.xlu0 %v295, 19
      %v376 = vpop.permute.xlu0 %375
      %377 = vrot.lane.b32.xlu0 %v296, 19
      %v378 = vpop.permute.xlu0 %377
      %379 = vrot.lane.b32.xlu0 %v292, 19
      %v380 = vpop.permute.xlu0 %379
      %381 = vrot.lane.b32.xlu0 %v298, 19
      %v382 = vpop.permute.xlu0 %381
      %383 = vrot.lane.b32.xlu0 %v304, 19
      %v384 = vpop.permute.xlu0 %383
      %385 = vrot.lane.b32.xlu0 %v305, 19
      %v386 = vpop.permute.xlu0 %385
      %387 = vrot.lane.b32.xlu0 %v302, 19
      %v388 = vpop.permute.xlu0 %387
      %389 = vrot.lane.b32.xlu0 %v307, 19
      %v390 = vpop.permute.xlu0 %389
      %391 = vrot.lane.b32.xlu0 %v313, 19
      %v392 = vpop.permute.xlu0 %391
      %393 = vrot.lane.b32.xlu0 %v314, 19
      %v394 = vpop.permute.xlu0 %393
      %395 = vrot.lane.b32.xlu0 %v311, 19
      %v396 = vpop.permute.xlu0 %395
      %397 = vrot.lane.b32.xlu0 %v316, 19
      %v398 = vpop.permute.xlu0 %397
      %399 = vrot.lane.b32.xlu0 %v322, 19
      %v400 = vpop.permute.xlu0 %399
      %401 = vrot.lane.b32.xlu0 %v323, 19
      %v402 = vpop.permute.xlu0 %401
      %403 = vrot.lane.b32.xlu0 %v320, 19
      %v404 = vpop.permute.xlu0 %403
      %405 = vrot.lane.b32.xlu0 %v325, 19
      %v406 = vpop.permute.xlu0 %405
      %407 = vrot.lane.b32.xlu0 %v331, 19
      %v408 = vpop.permute.xlu0 %407
      %409 = vrot.lane.b32.xlu0 %v332, 19
      %v410 = vpop.permute.xlu0 %409
      %411 = vrot.lane.b32.xlu0 %v329, 19
      %v412 = vpop.permute.xlu0 %411
      %413 = vrot.lane.b32.xlu0 %v334, 19
      %v414 = vpop.permute.xlu0 %413
      %415 = vrot.lane.b32.xlu0 %v340, 19
      %v416 = vpop.permute.xlu0 %415
      %417 = vrot.lane.b32.xlu0 %v341, 19
      %v418 = vpop.permute.xlu0 %417
      %419 = vrot.lane.b32.xlu0 %v338, 19
      %v420 = vpop.permute.xlu0 %419
      %vm421 = vcmask 154624
      %v422 = vsel %vm421, %v350, %v352
      %v423 = vsel %vm421, %v352, %v354
      %v424 = vsel %vm421, %v354, %v356
      %v425 = vsel %vm421, %v358, %v360
      %v426 = vsel %vm421, %v360, %v362
      %v427 = vsel %vm421, %v362, %v364
      %v428 = vsel %vm421, %v366, %v368
      %v429 = vsel %vm421, %v368, %v370
      %v430 = vsel %vm421, %v370, %v372
      %v431 = vsel %vm421, %v374, %v376
      %v432 = vsel %vm421, %v376, %v378
      %v433 = vsel %vm421, %v378, %v380
      %v434 = vsel %vm421, %v382, %v384
      %v435 = vsel %vm421, %v384, %v386
      %v436 = vsel %vm421, %v386, %v388
      %v437 = vsel %vm421, %v390, %v392
      %v438 = vsel %vm421, %v392, %v394
      %v439 = vsel %vm421, %v394, %v396
      %v440 = vsel %vm421, %v398, %v400
      %v441 = vsel %vm421, %v400, %v402
      %v442 = vsel %vm421, %v402, %v404
      %v443 = vsel %vm421, %v406, %v408
      %v444 = vsel %vm421, %v408, %v410
      %v445 = vsel %vm421, %v410, %v412
      %v446 = vsel %vm421, %v414, %v416
      %v447 = vsel %vm421, %v416, %v418
      %v448 = vsel %vm421, %v418, %v420
      %vm476 = vcmask 588800
      %v478 = vsel %vm476, %v342, 0
      %480 = vmatprep.subr.mxu0 %v423
      %481 = vmatpush1.msra.mxu0 %v422
      %482 = vmatprep.subr.mxu0 %v426
      %483 = vmatpush1.msra.mxu0 %v425
      %484 = vmatprep.subr.mxu0 %v429
      %485 = vmatpush1.msra.mxu0 %v428
      %486 = vmatprep.subr.mxu0 %v432
      %487 = vmatpush1.msra.mxu0 %v431
      %488 = vmatprep.subr.mxu0 %v435
      %489 = vmatpush1.msra.mxu0 %v434
      %490 = vmatprep.subr.mxu0 %v438
      %491 = vmatpush1.msra.mxu0 %v437
      %492 = vmatprep.subr.mxu0 %v441
      %493 = vmatpush1.msra.mxu0 %v440
      %494 = vmatprep.subr.mxu0 %v444
      %495 = vmatpush1.msra.mxu0 %v443
      %496 = vmatprep.subr.mxu0 %v447
      %497 = vmatpush1.msra.mxu0 %v446
      %498 = vmatprep.subr.mxu0 0.0
      %499 = vmatpush1.msra.mxu0 0.0
      %500 = vmatprep.subr.mxu0 0.0
      %501 = vmatpush1.msra.mxu0 0.0
      %502 = vmatprep.subr.mxu0 0.0
      %503 = vmatpush1.msra.mxu0 0.0
      %504 = vmatprep.subr.mxu0 0.0
      %505 = vmatpush1.msra.mxu0 0.0
      %506 = vmatprep.subr.mxu0 0.0
      %507 = vmatpush1.msra.mxu0 0.0
      %508 = vmatprep.subr.mxu0 0.0
      %509 = vmatpush1.msra.mxu0 0.0
      %510 = vmatprep.subr.mxu0 0.0
      %511 = vmatpush1.msra.mxu0 0.0
      %512 = vmatprep.subr.mxu0 0.0
      %513 = vmatpush1.msra.mxu0 0.0
      %514 = vmatprep.subr.mxu0 0.0
      %515 = vmatpush1.msra.mxu0 0.0
      %516 = vmatprep.subr.mxu0 0.0
      %517 = vmatpush1.msra.mxu0 0.0
      %518 = vmatprep.subr.mxu0 0.0
      %519 = vmatpush1.msra.mxu0 0.0
      %520 = vmatprep.subr.mxu0 0.0
      %521 = vmatpush1.msra.mxu0 0.0
      %522 = vmatprep.subr.mxu0 0.0
      %523 = vmatpush1.msra.mxu0 0.0
      %524 = vmatprep.subr.mxu0 0.0
      %525 = vmatpush1.msra.mxu0 0.0
      %526 = vmatprep.subr.mxu0 0.0
      %527 = vmatpush1.msra.mxu0 0.0
      %528 = vmatprep.subr.mxu0 0.0
      %529 = vmatpush1.msra.mxu0 0.0
      %530 = vmatprep.subr.mxu0 0.0
      %531 = vmatpush1.msra.mxu0 0.0
      %532 = vmatprep.subr.mxu0 0.0
      %533 = vmatpush1.msra.mxu0 0.0
      %534 = vmatprep.subr.mxu0 0.0
      %535 = vmatpush1.msra.mxu0 0.0
      %536 = vmatprep.subr.mxu0 0.0
      %537 = vmatpush1.msra.mxu0 0.0
      %538 = vmatprep.subr.mxu0 0.0
      %539 = vmatpush1.msra.mxu0 0.0
      %540 = vmatprep.subr.mxu0 0.0
      %541 = vmatpush1.msra.mxu0 0.0
      %542 = vmatprep.subr.mxu0 0.0
      %543 = vmatpush1.msra.mxu0 0.0
      %544 = vmatprep.mubr.f32.mxu0 0.0
      %545 = vmatmul.mubr.f32.gmra.mrb[0].mxu0 %v478
      %v546 = vpop.f32.mrb[0].mxu0
      %v547 = vadd.f32 %v347, %v546
      %v548 = vpop.f32.mrb[0].mxu0
      %v549 = vadd.f32 %v347, %v548
      %550 = vdwg.mxu0
      %551 = vmatprep.subr.mxu0 0.0
      %552 = vmatpush1.msra.mxu0 %v424
      %553 = vmatprep.subr.mxu0 0.0
      %554 = vmatpush1.msra.mxu0 %v427
      %555 = vmatprep.subr.mxu0 0.0
      %556 = vmatpush1.msra.mxu0 %v430
      %557 = vmatprep.subr.mxu0 0.0
      %558 = vmatpush1.msra.mxu0 %v433
      %559 = vmatprep.subr.mxu0 0.0
      %560 = vmatpush1.msra.mxu0 %v436
      %561 = vmatprep.subr.mxu0 0.0
      %562 = vmatpush1.msra.mxu0 %v439
      %563 = vmatprep.subr.mxu0 0.0
      %564 = vmatpush1.msra.mxu0 %v442
      %565 = vmatprep.subr.mxu0 0.0
      %566 = vmatpush1.msra.mxu0 %v445
      %567 = vmatprep.subr.mxu0 0.0
      %568 = vmatpush1.msra.mxu0 %v448
      %569 = vmatprep.subr.mxu0 0.0
      %570 = vmatpush1.msra.mxu0 0.0
      %571 = vmatprep.subr.mxu0 0.0
      %572 = vmatpush1.msra.mxu0 0.0
      %573 = vmatprep.subr.mxu0 0.0
      %574 = vmatpush1.msra.mxu0 0.0
      %575 = vmatprep.subr.mxu0 0.0
      %576 = vmatpush1.msra.mxu0 0.0
      %577 = vmatprep.subr.mxu0 0.0
      %578 = vmatpush1.msra.mxu0 0.0
      %579 = vmatprep.subr.mxu0 0.0
      %580 = vmatpush1.msra.mxu0 0.0
      %581 = vmatprep.subr.mxu0 0.0
      %582 = vmatpush1.msra.mxu0 0.0
      %583 = vmatprep.subr.mxu0 0.0
      %584 = vmatpush1.msra.mxu0 0.0
      %585 = vmatprep.subr.mxu0 0.0
      %586 = vmatpush1.msra.mxu0 0.0
      %587 = vmatprep.subr.mxu0 0.0
      %588 = vmatpush1.msra.mxu0 0.0
      %589 = vmatprep.subr.mxu0 0.0
      %590 = vmatpush1.msra.mxu0 0.0
      %591 = vmatprep.subr.mxu0 0.0
      %592 = vmatpush1.msra.mxu0 0.0
      %593 = vmatprep.subr.mxu0 0.0
      %594 = vmatpush1.msra.mxu0 0.0
      %595 = vmatprep.subr.mxu0 0.0
      %596 = vmatpush1.msra.mxu0 0.0
      %597 = vmatprep.subr.mxu0 0.0
      %598 = vmatpush1.msra.mxu0 0.0
      %599 = vmatprep.subr.mxu0 0.0
      %600 = vmatpush1.msra.mxu0 0.0
      %601 = vmatprep.subr.mxu0 0.0
      %602 = vmatpush1.msra.mxu0 0.0
      %603 = vmatprep.subr.mxu0 0.0
      %604 = vmatpush1.msra.mxu0 0.0
      %605 = vmatprep.subr.mxu0 0.0
      %606 = vmatpush1.msra.mxu0 0.0
      %607 = vmatprep.subr.mxu0 0.0
      %608 = vmatpush1.msra.mxu0 0.0
      %609 = vmatprep.subr.mxu0 0.0
      %610 = vmatpush1.msra.mxu0 0.0
      %611 = vmatprep.subr.mxu0 0.0
      %612 = vmatpush1.msra.mxu0 0.0
      %613 = vmatprep.subr.mxu0 0.0
      %614 = vmatpush1.msra.mxu0 0.0
      %615 = vmatprep.mubr.f32.mxu0 0.0
      %616 = vmatmul.mubr.f32.gmra.mrb[0].mxu0 %v478
      %v617 = vpop.f32.mrb[0].mxu0
      %v618 = vadd.f32 %v347, %v617
      %v619 = vpop.f32.mrb[0].mxu0
      %620 = vdwg.mxu0
      %v621 = vmax.f32 %v547, 0.0
      %v622 = vmax.f32 %v549, 0.0
      %v623 = vmax.f32 %v618, 0.0
      %v625 = vlaneseq
      %v626 = vshrl.u32 %v625, 7
      %v627 = vsub.s32 0, %v626
      %v628 = vrot.slane %v252, %v627
      %v629 = vlaneseq
      %v630 = vshrl.u32 %v629, 7
      %v631 = vsub.s32 1, %v630
      %v632 = vrot.slane %v252, %v631
      %v633 = vlaneseq
      %v634 = vshrl.u32 %v633, 7
      %v635 = vsub.s32 2, %v634
      %v636 = vrot.slane %v252, %v635
      %v640 = vmul.f32 %v621, %v628
      %v641 = vmul.f32 %v622, %v632
      %v642 = vmul.f32 %v623, %v636
      %643 = vst [vmem:[#allocation2] sm:$0xff] 0.0
      %644 = vst [vmem:[#allocation2 + $0x8] sm:$0xff] 0.0
      %645 = vst [vmem:[#allocation2 + $0x10] sm:$0xff] 0.0
      %646 = vst [vmem:[#allocation2 + $0x18] sm:$0xff] 0.0
      %vm647 = vcmask 556032
      %648 = vst.msk [vmem:[#allocation2 + $0x20] sm:$0xff] %vm647, 0.0
      %649 = vst [vmem:[#allocation2 + $0x8] sm:$0xff] %v640
      %650 = vst [vmem:[#allocation2 + $0x10] sm:$0xff] %v641
      %651 = vst.msk [vmem:[#allocation2 + $0x18] sm:$0xff] %vm647, %v642
      %v652 = vld [vmem:[#allocation2] sm:$0xff]
      %v653 = vld [vmem:[#allocation2 + $0x8] sm:$0xff]
      %v654 = vld [vmem:[#allocation2 + $0x10] sm:$0xff]
      %v655 = vld [vmem:[#allocation2 + $0x18] sm:$0xff]
      %660 = vrot.lane.b32.xlu0 %v652, 127
      %v661 = vpop.permute.xlu0 %660
      %662 = vrot.lane.b32.xlu0 %v653, 127
      %v663 = vpop.permute.xlu0 %662
      %664 = vrot.lane.b32.xlu0 %v654, 127
      %v665 = vpop.permute.xlu0 %664
      %666 = vrot.lane.b32.xlu0 %v655, 127
      %v667 = vpop.permute.xlu0 %666
      %v668 = vsel %vm269, %v661, %v663
      %v669 = vsel %vm269, %v663, %v665
      %v670 = vsel %vm269, %v665, %v667
      %671 = vrot.lane.b32.xlu0 %v652, 126
      %v672 = vpop.permute.xlu0 %671
      %673 = vrot.lane.b32.xlu0 %v653, 126
      %v674 = vpop.permute.xlu0 %673
      %675 = vrot.lane.b32.xlu0 %v654, 126
      %v676 = vpop.permute.xlu0 %675
      %677 = vrot.lane.b32.xlu0 %v655, 126
      %v678 = vpop.permute.xlu0 %677
      %v679 = vsel %vm281, %v672, %v674
      %v680 = vsel %vm281, %v674, %v676
      %v681 = vsel %vm281, %v676, %v678
      %682 = vrot.lane.b32.xlu0 %v652, 110
      %v683 = vpop.permute.xlu0 %682
      %684 = vrot.lane.b32.xlu0 %v653, 110
      %v685 = vpop.permute.xlu0 %684
      %686 = vrot.lane.b32.xlu0 %v654, 110
      %v687 = vpop.permute.xlu0 %686
      %688 = vrot.lane.b32.xlu0 %v655, 110
      %v689 = vpop.permute.xlu0 %688
      %v690 = vsel %vm293, %v683, %v685
      %v691 = vsel %vm293, %v685, %v687
      %v692 = vsel %vm293, %v687, %v689
      %693 = vrot.lane.b32.xlu0 %v653, 109
      %v694 = vpop.permute.xlu0 %693
      %695 = vrot.lane.b32.xlu0 %v654, 109
      %v696 = vpop.permute.xlu0 %695
      %697 = vrot.lane.b32.xlu0 %v655, 109
      %v698 = vpop.permute.xlu0 %697
      %v699 = vsel %vm303, %v694, %v696
      %v700 = vsel %vm303, %v696, %v698
      %701 = vrot.lane.b32.xlu0 %v653, 108
      %v702 = vpop.permute.xlu0 %701
      %703 = vrot.lane.b32.xlu0 %v654, 108
      %v704 = vpop.permute.xlu0 %703
      %705 = vrot.lane.b32.xlu0 %v655, 108
      %v706 = vpop.permute.xlu0 %705
      %v707 = vsel %vm312, %v702, %v704
      %v708 = vsel %vm312, %v704, %v706
      %709 = vrot.lane.b32.xlu0 %v653, 92
      %v710 = vpop.permute.xlu0 %709
      %711 = vrot.lane.b32.xlu0 %v654, 92
      %v712 = vpop.permute.xlu0 %711
      %713 = vrot.lane.b32.xlu0 %v655, 92
      %v714 = vpop.permute.xlu0 %713
      %v715 = vsel %vm321, %v710, %v712
      %v716 = vsel %vm321, %v712, %v714
      %717 = vrot.lane.b32.xlu0 %v653, 91
      %v718 = vpop.permute.xlu0 %717
      %719 = vrot.lane.b32.xlu0 %v654, 91
      %v720 = vpop.permute.xlu0 %719
      %721 = vrot.lane.b32.xlu0 %v655, 91
      %v722 = vpop.permute.xlu0 %721
      %v723 = vsel %vm330, %v718, %v720
      %v724 = vsel %vm330, %v720, %v722
      %725 = vrot.lane.b32.xlu0 %v653, 90
      %v726 = vpop.permute.xlu0 %725
      %727 = vrot.lane.b32.xlu0 %v654, 90
      %v728 = vpop.permute.xlu0 %727
      %729 = vrot.lane.b32.xlu0 %v655, 90
      %v730 = vpop.permute.xlu0 %729
      %v731 = vsel %vm339, %v726, %v728
      %v732 = vsel %vm339, %v728, %v730
      %v733 = vld [vmem:[%s3] sm:$0xff]
      %v734 = vld [vmem:[%s4] sm:$0xff]
      %736 = vset.pattern.permute.xlu0 0
      %737 = vperm.xlu0 %736, %v734
      %v738 = vpop.permute.xlu0 %737
      %740 = vrot.lane.b32.xlu0 %v652, 19
      %v741 = vpop.permute.xlu0 %740
      %742 = vrot.lane.b32.xlu0 %v653, 19
      %v743 = vpop.permute.xlu0 %742
      %744 = vrot.lane.b32.xlu0 %v654, 19
      %v745 = vpop.permute.xlu0 %744
      %746 = vrot.lane.b32.xlu0 %v655, 19
      %v747 = vpop.permute.xlu0 %746
      %748 = vrot.lane.b32.xlu0 %v668, 19
      %v749 = vpop.permute.xlu0 %748
      %750 = vrot.lane.b32.xlu0 %v669, 19
      %v751 = vpop.permute.xlu0 %750
      %752 = vrot.lane.b32.xlu0 %v670, 19
      %v753 = vpop.permute.xlu0 %752
      %754 = vrot.lane.b32.xlu0 %v667, 19
      %v755 = vpop.permute.xlu0 %754
      %756 = vrot.lane.b32.xlu0 %v679, 19
      %v757 = vpop.permute.xlu0 %756
      %758 = vrot.lane.b32.xlu0 %v680, 19
      %v759 = vpop.permute.xlu0 %758
      %760 = vrot.lane.b32.xlu0 %v681, 19
      %v761 = vpop.permute.xlu0 %760
      %762 = vrot.lane.b32.xlu0 %v678, 19
      %v763 = vpop.permute.xlu0 %762
      %764 = vrot.lane.b32.xlu0 %v690, 19
      %v765 = vpop.permute.xlu0 %764
      %766 = vrot.lane.b32.xlu0 %v691, 19
      %v767 = vpop.permute.xlu0 %766
      %768 = vrot.lane.b32.xlu0 %v692, 19
      %v769 = vpop.permute.xlu0 %768
      %770 = vrot.lane.b32.xlu0 %v689, 19
      %v771 = vpop.permute.xlu0 %770
      %772 = vrot.lane.b32.xlu0 %v694, 19
      %v773 = vpop.permute.xlu0 %772
      %774 = vrot.lane.b32.xlu0 %v699, 19
      %v775 = vpop.permute.xlu0 %774
      %776 = vrot.lane.b32.xlu0 %v700, 19
      %v777 = vpop.permute.xlu0 %776
      %778 = vrot.lane.b32.xlu0 %v698, 19
      %v779 = vpop.permute.xlu0 %778
      %780 = vrot.lane.b32.xlu0 %v702, 19
      %v781 = vpop.permute.xlu0 %780
      %782 = vrot.lane.b32.xlu0 %v707, 19
      %v783 = vpop.permute.xlu0 %782
      %784 = vrot.lane.b32.xlu0 %v708, 19
      %v785 = vpop.permute.xlu0 %784
      %786 = vrot.lane.b32.xlu0 %v706, 19
      %v787 = vpop.permute.xlu0 %786
      %788 = vrot.lane.b32.xlu0 %v710, 19
      %v789 = vpop.permute.xlu0 %788
      %790 = vrot.lane.b32.xlu0 %v715, 19
      %v791 = vpop.permute.xlu0 %790
      %792 = vrot.lane.b32.xlu0 %v716, 19
      %v793 = vpop.permute.xlu0 %792
      %794 = vrot.lane.b32.xlu0 %v714, 19
      %v795 = vpop.permute.xlu0 %794
      %796 = vrot.lane.b32.xlu0 %v718, 19
      %v797 = vpop.permute.xlu0 %796
      %798 = vrot.lane.b32.xlu0 %v723, 19
      %v799 = vpop.permute.xlu0 %798
      %800 = vrot.lane.b32.xlu0 %v724, 19
      %v801 = vpop.permute.xlu0 %800
      %802 = vrot.lane.b32.xlu0 %v722, 19
      %v803 = vpop.permute.xlu0 %802
      %804 = vrot.lane.b32.xlu0 %v726, 19
      %v805 = vpop.permute.xlu0 %804
      %806 = vrot.lane.b32.xlu0 %v731, 19
      %v807 = vpop.permute.xlu0 %806
      %808 = vrot.lane.b32.xlu0 %v732, 19
      %v809 = vpop.permute.xlu0 %808
      %810 = vrot.lane.b32.xlu0 %v730, 19
      %v811 = vpop.permute.xlu0 %810
      %v812 = vsel %vm421, %v741, %v743
      %v813 = vsel %vm421, %v743, %v745
      %v814 = vsel %vm421, %v745, %v747
      %v815 = vsel %vm421, %v749, %v751
      %v816 = vsel %vm421, %v751, %v753
      %v817 = vsel %vm421, %v753, %v755
      %v818 = vsel %vm421, %v757, %v759
      %v819 = vsel %vm421, %v759, %v761
      %v820 = vsel %vm421, %v761, %v763
      %v821 = vsel %vm421, %v765, %v767
      %v822 = vsel %vm421, %v767, %v769
      %v823 = vsel %vm421, %v769, %v771
      %v824 = vsel %vm421, %v773, %v775
      %v825 = vsel %vm421, %v775, %v777
      %v826 = vsel %vm421, %v777, %v779
      %v827 = vsel %vm421, %v781, %v783
      %v828 = vsel %vm421, %v783, %v785
      %v829 = vsel %vm421, %v785, %v787
      %v830 = vsel %vm421, %v789, %v791
      %v831 = vsel %vm421, %v791, %v793
      %v832 = vsel %vm421, %v793, %v795
      %v833 = vsel %vm421, %v797, %v799
      %v834 = vsel %vm421, %v799, %v801
      %v835 = vsel %vm421, %v801, %v803
      %v836 = vsel %vm421, %v805, %v807
      %v837 = vsel %vm421, %v807, %v809
      %v838 = vsel %vm421, %v809, %v811
      %v867 = vsel %vm476, %v733, 0
      %869 = vmatprep.subr.mxu0 %v813
      %870 = vmatpush1.msra.mxu0 %v812
      %871 = vmatprep.subr.mxu0 %v816
      %872 = vmatpush1.msra.mxu0 %v815
      %873 = vmatprep.subr.mxu0 %v819
      %874 = vmatpush1.msra.mxu0 %v818
      %875 = vmatprep.subr.mxu0 %v822
      %876 = vmatpush1.msra.mxu0 %v821
      %877 = vmatprep.subr.mxu0 %v825
      %878 = vmatpush1.msra.mxu0 %v824
      %879 = vmatprep.subr.mxu0 %v828
      %880 = vmatpush1.msra.mxu0 %v827
      %881 = vmatprep.subr.mxu0 %v831
      %882 = vmatpush1.msra.mxu0 %v830
      %883 = vmatprep.subr.mxu0 %v834
      %884 = vmatpush1.msra.mxu0 %v833
      %885 = vmatprep.subr.mxu0 %v837
      %886 = vmatpush1.msra.mxu0 %v836
      %887 = vmatprep.subr.mxu0 0.0
      %888 = vmatpush1.msra.mxu0 0.0
      %889 = vmatprep.subr.mxu0 0.0
      %890 = vmatpush1.msra.mxu0 0.0
      %891 = vmatprep.subr.mxu0 0.0
      %892 = vmatpush1.msra.mxu0 0.0
      %893 = vmatprep.subr.mxu0 0.0
      %894 = vmatpush1.msra.mxu0 0.0
      %895 = vmatprep.subr.mxu0 0.0
      %896 = vmatpush1.msra.mxu0 0.0
      %897 = vmatprep.subr.mxu0 0.0
      %898 = vmatpush1.msra.mxu0 0.0
      %899 = vmatprep.subr.mxu0 0.0
      %900 = vmatpush1.msra.mxu0 0.0
      %901 = vmatprep.subr.mxu0 0.0
      %902 = vmatpush1.msra.mxu0 0.0
      %903 = vmatprep.subr.mxu0 0.0
      %904 = vmatpush1.msra.mxu0 0.0
      %905 = vmatprep.subr.mxu0 0.0
      %906 = vmatpush1.msra.mxu0 0.0
      %907 = vmatprep.subr.mxu0 0.0
      %908 = vmatpush1.msra.mxu0 0.0
      %909 = vmatprep.subr.mxu0 0.0
      %910 = vmatpush1.msra.mxu0 0.0
      %911 = vmatprep.subr.mxu0 0.0
      %912 = vmatpush1.msra.mxu0 0.0
      %913 = vmatprep.subr.mxu0 0.0
      %914 = vmatpush1.msra.mxu0 0.0
      %915 = vmatprep.subr.mxu0 0.0
      %916 = vmatpush1.msra.mxu0 0.0
      %917 = vmatprep.subr.mxu0 0.0
      %918 = vmatpush1.msra.mxu0 0.0
      %919 = vmatprep.subr.mxu0 0.0
      %920 = vmatpush1.msra.mxu0 0.0
      %921 = vmatprep.subr.mxu0 0.0
      %922 = vmatpush1.msra.mxu0 0.0
      %923 = vmatprep.subr.mxu0 0.0
      %924 = vmatpush1.msra.mxu0 0.0
      %925 = vmatprep.subr.mxu0 0.0
      %926 = vmatpush1.msra.mxu0 0.0
      %927 = vmatprep.subr.mxu0 0.0
      %928 = vmatpush1.msra.mxu0 0.0
      %929 = vmatprep.subr.mxu0 0.0
      %930 = vmatpush1.msra.mxu0 0.0
      %931 = vmatprep.subr.mxu0 0.0
      %932 = vmatpush1.msra.mxu0 0.0
      %933 = vmatprep.mubr.f32.mxu0 0.0
      %934 = vmatmul.mubr.f32.gmra.mrb[0].mxu0 %v867
      %v935 = vpop.f32.mrb[0].mxu0
      %v936 = vadd.f32 %v738, %v935
      %v937 = vpop.f32.mrb[0].mxu0
      %v938 = vadd.f32 %v738, %v937
      %939 = vdwg.mxu0
      %940 = vmatprep.subr.mxu0 0.0
      %941 = vmatpush1.msra.mxu0 %v814
      %942 = vmatprep.subr.mxu0 0.0
      %943 = vmatpush1.msra.mxu0 %v817
      %944 = vmatprep.subr.mxu0 0.0
      %945 = vmatpush1.msra.mxu0 %v820
      %946 = vmatprep.subr.mxu0 0.0
      %947 = vmatpush1.msra.mxu0 %v823
      %948 = vmatprep.subr.mxu0 0.0
      %949 = vmatpush1.msra.mxu0 %v826
      %950 = vmatprep.subr.mxu0 0.0
      %951 = vmatpush1.msra.mxu0 %v829
      %952 = vmatprep.subr.mxu0 0.0
      %953 = vmatpush1.msra.mxu0 %v832
      %954 = vmatprep.subr.mxu0 0.0
      %955 = vmatpush1.msra.mxu0 %v835
      %956 = vmatprep.subr.mxu0 0.0
      %957 = vmatpush1.msra.mxu0 %v838
      %958 = vmatprep.subr.mxu0 0.0
      %959 = vmatpush1.msra.mxu0 0.0
      %960 = vmatprep.subr.mxu0 0.0
      %961 = vmatpush1.msra.mxu0 0.0
      %962 = vmatprep.subr.mxu0 0.0
      %963 = vmatpush1.msra.mxu0 0.0
      %964 = vmatprep.subr.mxu0 0.0
      %965 = vmatpush1.msra.mxu0 0.0
      %966 = vmatprep.subr.mxu0 0.0
      %967 = vmatpush1.msra.mxu0 0.0
      %968 = vmatprep.subr.mxu0 0.0
      %969 = vmatpush1.msra.mxu0 0.0
      %970 = vmatprep.subr.mxu0 0.0
      %971 = vmatpush1.msra.mxu0 0.0
      %972 = vmatprep.subr.mxu0 0.0
      %973 = vmatpush1.msra.mxu0 0.0
      %974 = vmatprep.subr.mxu0 0.0
      %975 = vmatpush1.msra.mxu0 0.0
      %976 = vmatprep.subr.mxu0 0.0
      %977 = vmatpush1.msra.mxu0 0.0
      %978 = vmatprep.subr.mxu0 0.0
      %979 = vmatpush1.msra.mxu0 0.0
      %980 = vmatprep.subr.mxu0 0.0
      %981 = vmatpush1.msra.mxu0 0.0
      %982 = vmatprep.subr.mxu0 0.0
      %983 = vmatpush1.msra.mxu0 0.0
      %984 = vmatprep.subr.mxu0 0.0
      %985 = vmatpush1.msra.mxu0 0.0
      %986 = vmatprep.subr.mxu0 0.0
      %987 = vmatpush1.msra.mxu0 0.0
      %988 = vmatprep.subr.mxu0 0.0
      %989 = vmatpush1.msra.mxu0 0.0
      %990 = vmatprep.subr.mxu0 0.0
      %991 = vmatpush1.msra.mxu0 0.0
      %992 = vmatprep.subr.mxu0 0.0
      %993 = vmatpush1.msra.mxu0 0.0
      %994 = vmatprep.subr.mxu0 0.0
      %995 = vmatpush1.msra.mxu0 0.0
      %996 = vmatprep.subr.mxu0 0.0
      %997 = vmatpush1.msra.mxu0 0.0
      %998 = vmatprep.subr.mxu0 0.0
      %999 = vmatpush1.msra.mxu0 0.0
      %1000 = vmatprep.subr.mxu0 0.0
      %1001 = vmatpush1.msra.mxu0 0.0
      %1002 = vmatprep.subr.mxu0 0.0
      %1003 = vmatpush1.msra.mxu0 0.0
      %1004 = vmatprep.mubr.f32.mxu0 0.0
      %1005 = vmatmul.mubr.f32.gmra.mrb[0].mxu0 %v867
      %v1006 = vpop.f32.mrb[0].mxu0
      %v1007 = vadd.f32 %v738, %v1006
      %v1008 = vpop.f32.mrb[0].mxu0
      %1009 = vdwg.mxu0
      %v1010 = vld [vmem:[%s246 + $0x8] sm:$0xff]
      %v1011 = vld [vmem:[%s246 + $0x10] sm:$0xff]
      %v1012 = vld [vmem:[%s246 + $0x18] sm:$0xff]
      %v1013 = vadd.f32 %v936, %v1010
      %v1014 = vadd.f32 %v938, %v1011
      %v1015 = vadd.f32 %v1007, %v1012
      %v1016 = vmax.f32 %v1013, 0.0
      %v1017 = vmax.f32 %v1014, 0.0
      %v1018 = vmax.f32 %v1015, 0.0
      %1019 = vst [vmem:[%s251] sm:$0xff] %v1016
      %1020 = vst [vmem:[%s251 + $0x8] sm:$0xff] %v1017
      %1021 = vst.msk [vmem:[%s251 + $0x10] sm:$0xff] %vm647, %v1018
      %p1022 = scmp.lt.s32.totalorder %s17, 1
      %s1023 = scalar_select %p1022, %s17, 1
      %s1024 = smul.addr %s1023, 3
      %s1025 = smul.addr %s1024, 8
      %s1026 = scalar_lea.vmem %s6, %s1025
      // Predicated region
      $region45: #{residual_block_forward.1} parent=43 // pred_check
        %p1027 = pneg %p166
      $region46: #{residual_block_forward.1} parent=43 // pred_check_branch
        %1029 = sbr.rel (%p1027) target = $region48
      $region47: #{residual_block_forward.1} parent=43 // pred_region
        _
      $region48: #{residual_block_forward.1} parent=43 // pred_fallthru
        _
    $region44: #{residual_block_forward.1} parent=5 // pred_fallthru
      _
    %p1030 = scmp.le.s32.totalorder 2, %s12
    // Predicated region
    $region49: #{residual_block_forward.1} parent=5 // pred_check
      %p1031 = pneg %p1030
    $region50: #{residual_block_forward.1} parent=5 // pred_check_branch
      %1033 = sbr.rel (%p1031) target = $region52
    $region51: #{residual_block_forward.1} parent=5 // pred_region
      %s1034 = ssub.s32 %s12, 2
      // Predicated region
      $region53: #{residual_block_forward.1} parent=51 // pred_check
        %p1035 = pneg %p172
      $region54: #{residual_block_forward.1} parent=51 // pred_check_branch
        %1037 = sbr.rel (%p1035) target = $region56
      $region55: #{residual_block_forward.1} parent=51 // pred_region
        %p1038 = scmp.lt.s32.totalorder %s18, 1
        %s1039 = scalar_select %p1038, %s18, 1
        %s1040 = smul.addr %s1039, 3
        %s1041 = smul.addr %s1040, 8
        %s1042 = scalar_lea.vmem %s6, %s1041
      $region56: #{residual_block_forward.1} parent=51 // pred_fallthru
        _
    $region52: #{residual_block_forward.1} parent=5 // pred_fallthru
      _
  $region6: #{residual_block_forward.1} parent=0 // loop_footer
    %s16 = sadd.s32 1, %s12
  $region7: #{residual_block_forward.1} parent=0 // loop_footer_branch
    %11 = sbr.rel target = $region3
  $region8: #{residual_block_forward.1} parent=0 // loop_exit
    _

</llo_original>
